<compile_context>
chip_gen: v7x
topology: tpu7x:2x2x1
jax: 0.10.0
libtpu: 0.0.40
codegen_flags: <defaults>
</compile_context>

<pallas_src>
import functools

import jax
import jax.numpy as jnp
from jax.experimental import pallas as pl
from jax.experimental.pallas import tpu as pltpu


def _round_up(x: int, m: int) -> int:
    return ((x + m - 1) // m) * m


def _choose_block_rows(n_rows: int, n_classes: int, itemsize: int) -> int:
    # Size the logits tile so the double-buffered pipeline stays comfortably
    # under the default 32 MiB scoped-VMEM limit (and v7x's 64 MiB physical
    # VMEM), leaving room for the in-kernel f32 temporaries.
    budget = 8 * 1024 * 1024
    tb = budget // max(1, 2 * n_classes * itemsize)
    tb = max(8, min(1024, (tb // 8) * 8))
    tb = min(tb, _round_up(n_rows, 8))
    return max(8, tb)


def _make_ce_label_kernel(temperature: float):
    """Integer-label path: one-hot built in-kernel, no HBM one-hot traffic."""
    inv_t = 1.0 / float(temperature)

    def kernel(logits_ref, labels_ref, w_ref, out_ref):
        x = logits_ref[...].astype(jnp.float32) * inv_t                # (TB, C)
        m = jnp.max(x, axis=-1, keepdims=True)                         # (TB, 1)
        lse = jnp.log(jnp.sum(jnp.exp(x - m), axis=-1, keepdims=True)) # (TB, 1)

        tb, c = x.shape
        onehot = (jax.lax.broadcasted_iota(jnp.int32, (tb, c), 1)
                  == labels_ref[...])                                  # (TB, C) bool

        picked_x = jnp.sum(jnp.where(onehot, x, 0.0), axis=-1, keepdims=True)
        w = w_ref[...].astype(jnp.float32)                             # (1, C)
        picked_w = jnp.sum(jnp.where(onehot, w, 0.0), axis=-1, keepdims=True)

        # -logp[y] = m + lse - x[y]   (per row), weighted by the class weight.
        out_ref[...] = picked_w * (m + lse - picked_x)                 # (TB, 1)

    return kernel


def _make_ce_dense_kernel(temperature: float):
    """Dense (already one-hot / binarised) target path."""
    inv_t = 1.0 / float(temperature)

    def kernel(logits_ref, target_ref, w_ref, out_ref):
        x = logits_ref[...].astype(jnp.float32) * inv_t                # (TB, C)
        m = jnp.max(x, axis=-1, keepdims=True)
        lse = jnp.log(jnp.sum(jnp.exp(x - m), axis=-1, keepdims=True))

        tw = target_ref[...].astype(jnp.float32) * w_ref[...].astype(jnp.float32)
        # sum_c t*w*(-logp) = (m+lse)*sum_c(t*w) - sum_c(t*w*x)
        out_ref[...] = ((m + lse) * jnp.sum(tw, axis=-1, keepdims=True)
                        - jnp.sum(tw * x, axis=-1, keepdims=True))

    return kernel


@functools.partial(jax.jit, static_argnames=("temperature", "reduction", "n_classes"))
def ce_loss(logits, target, class_weights=None, *, temperature=1.0,
            reduction="mean", n_classes=None):
    """JAX/Pallas equivalent of CELoss.forward (from_logits=True, multilabel=False).

    logits: (..., C) in native dtype (bf16 or f32); target: integer labels (...)
    or dense one-hot/binarised (..., C); class_weights: (C,) or None (-> ones).
    """
    if reduction not in ("mean", "sum", "none"):
        raise ValueError("reduction must be one of mean, sum, none")

    *batch_dims, C = logits.shape
    if n_classes is None:
        n_classes = C

    n_rows = 1
    for d in batch_dims:
        n_rows *= d

    logits2d = logits.reshape(n_rows, C)          # keep native dtype (bf16 OK)

    if class_weights is None:
        w = jnp.ones((1, C), jnp.float32)
    else:
        w = class_weights.reshape(1, C).astype(jnp.float32)

    integer_labels = target.ndim < logits.ndim

    itemsize = logits2d.dtype.itemsize
    tb = _choose_block_rows(n_rows, C, itemsize)
    rows_pad = _round_up(n_rows, tb)
    pad = rows_pad - n_rows
    logits_p = jnp.pad(logits2d, ((0, pad), (0, 0))) if pad else logits2d

    grid = (rows_pad // tb,)
    logits_spec = pl.BlockSpec((tb, C), lambda i: (i, 0))
    w_spec = pl.BlockSpec((1, C), lambda i: (0, 0))      # resident, not re-DMA'd
    out_spec = pl.BlockSpec((tb, 1), lambda i: (i, 0))
    out_shape = jax.ShapeDtypeStruct((rows_pad, 1), jnp.float32)

    cost = pl.CostEstimate(
        flops=6 * n_rows * C,
        transcendentals=n_rows * C,
        bytes_accessed=rows_pad * C * itemsize + rows_pad * 4 + C * 4 + rows_pad * 4,
    )
    params = pltpu.CompilerParams(dimension_semantics=("parallel",))

    if integer_labels:
        labels = target.reshape(n_rows, 1).astype(jnp.int32)
        labels_p = jnp.pad(labels, ((0, pad), (0, 0))) if pad else labels
        out = pl.pallas_call(
            _make_ce_label_kernel(temperature),
            out_shape=out_shape,
            grid=grid,
            in_specs=[logits_spec,
                      pl.BlockSpec((tb, 1), lambda i: (i, 0)),
                      w_spec],
            out_specs=out_spec,
            compiler_params=params,
            cost_estimate=cost,
        )(logits_p, labels_p, w)
    else:
        tgt = target.reshape(n_rows, C).astype(jnp.float32)
        tgt_p = jnp.pad(tgt, ((0, pad), (0, 0))) if pad else tgt
        out = pl.pallas_call(
            _make_ce_dense_kernel(temperature),
            out_shape=out_shape,
            grid=grid,
            in_specs=[logits_spec,
                      pl.BlockSpec((tb, C), lambda i: (i, 0)),
                      w_spec],
            out_specs=out_spec,
            compiler_params=params,
            cost_estimate=cost,
        )(logits_p, tgt_p, w)

    per_row = out[:n_rows, 0]
    if reduction == "mean":
        return jnp.mean(per_row)          # the module uses torch.mean (divide by B)
    if reduction == "sum":
        return jnp.sum(per_row)
    return per_row.reshape(tuple(batch_dims))


def _reference(logits, target_idx, class_weights, temperature=1.0, reduction="mean"):
    t = jax.nn.one_hot(target_idx, logits.shape[-1], dtype=jnp.float32)
    logp = jax.nn.log_softmax(logits.astype(jnp.float32) / temperature, axis=-1)
    per_row = jnp.sum(-t * logp * class_weights[None, :], axis=-1)
    if reduction == "mean":
        return jnp.mean(per_row)
    if reduction == "sum":
        return jnp.sum(per_row)
    return per_row


if __name__ == "__main__":
    key = jax.random.PRNGKey(0)
    k1, k2, k3 = jax.random.split(key, 3)

    B, C = 8, 32
    temperature = 2.0

    logits = jax.random.normal(k1, (B, C), dtype=jnp.float32)
    labels = jax.random.randint(k2, (B,), 0, C)                      # integer labels
    class_weights = jax.random.uniform(k3, (C,), dtype=jnp.float32) + 0.5

    # Integer-label path, 'mean'.
    loss = jax.block_until_ready(
        ce_loss(logits, labels, class_weights,
                temperature=temperature, reduction="mean", n_classes=C))
    ref = _reference(logits, labels, class_weights, temperature, "mean")
    assert jnp.allclose(loss, ref, rtol=1e-5, atol=1e-5), (loss, ref)

    # Integer-label path, 'none'.
    per_ex = jax.block_until_ready(
        ce_loss(logits, labels, class_weights,
                temperature=temperature, reduction="none", n_classes=C))
    ref_none = _reference(logits, labels, class_weights, temperature, "none")
    assert jnp.allclose(per_ex, ref_none, rtol=1e-5, atol=1e-5)

    # Dense (already one-hot) target path, 'sum'.
    onehot = jax.nn.one_hot(labels, C, dtype=jnp.float32)
    loss_sum = jax.block_until_ready(
        ce_loss(logits, onehot, class_weights,
                temperature=temperature, reduction="sum", n_classes=C))
    ref_sum = _reference(logits, labels, class_weights, temperature, "sum")
    assert jnp.allclose(loss_sum, ref_sum, rtol=1e-5, atol=1e-5)

    # bf16 logits stay bf16 in HBM (half the DMA bytes); f32 math in-kernel.
    logits_bf16 = logits.astype(jnp.bfloat16)
    loss_bf = jax.block_until_ready(
        ce_loss(logits_bf16, labels, class_weights,
                temperature=temperature, reduction="mean", n_classes=C))
    ref_bf = _reference(logits_bf16.astype(jnp.float32), labels, class_weights,
                        temperature, "mean")
    assert jnp.allclose(loss_bf, ref_bf, rtol=1e-4, atol=1e-4)

    print("KERNEL_OK")
</pallas_src>

<mosaic_0001>
module attributes {stable_mosaic.version = 11 : i64} {
  func.func @kernel(%arg0: i32, %arg1: memref<8x32xf32, #tpu.memory_space<vmem>>, %arg2: memref<8x1xi32, #tpu.memory_space<vmem>>, %arg3: memref<1x32xf32, #tpu.memory_space<vmem>>, %arg4: memref<8x1xf32, #tpu.memory_space<vmem>>) attributes {dimension_semantics = [#tpu.dimension_semantics<parallel>], iteration_bounds = array<i64: 1>, scalar_prefetch = 0 : i64, scratch_operands = 0 : i64, tpu.core_type = #tpu.core_type<tc>, window_params = [{transform_indices = @transform_0, window_bounds = array<i64: 8, 32>}, {transform_indices = @transform_1, window_bounds = array<i64: 8, 1>}, {pipeline_mode = #tpu.pipeline_mode<synchronous>, transform_indices = @transform_2, window_bounds = array<i64: 1, 32>}, {transform_indices = @transform_3, window_bounds = array<i64: 8, 1>}]} {
    %c0 = arith.constant 0 : index
    %c0_0 = arith.constant 0 : index
    %0 = vector.load %arg1[%c0, %c0_0] : memref<8x32xf32, #tpu.memory_space<vmem>>, vector<8x32xf32>
    %cst = arith.constant 5.000000e-01 : f32
    %1 = vector.broadcast %cst : f32 to vector<8x32xf32>
    %2 = arith.mulf %0, %1 : vector<8x32xf32>
    %cst_1 = arith.constant dense<0xFF800000> : vector<8xf32>
    %3 = vector.multi_reduction <maximumf>, %2, %cst_1 [1] : vector<8x32xf32> to vector<8xf32>
    %4 = vector.shape_cast %3 : vector<8xf32> to vector<8x1xf32>
    %5 = vector.broadcast %4 : vector<8x1xf32> to vector<8x32xf32>
    %6 = arith.subf %2, %5 : vector<8x32xf32>
    %7 = math.exp %6 : vector<8x32xf32>
    %cst_2 = arith.constant dense<0.000000e+00> : vector<8xf32>
    %8 = vector.multi_reduction <add>, %7, %cst_2 [1] : vector<8x32xf32> to vector<8xf32>
    %9 = vector.shape_cast %8 : vector<8xf32> to vector<8x1xf32>
    %10 = math.log %9 : vector<8x1xf32>
    %11 = tpu.iota {dimensions = array<i32: 1>} : vector<8x32xi32>
    %c0_3 = arith.constant 0 : index
    %c0_4 = arith.constant 0 : index
    %12 = vector.load %arg2[%c0_3, %c0_4] : memref<8x1xi32, #tpu.memory_space<vmem>>, vector<8x1xi32>
    %13 = vector.broadcast %12 : vector<8x1xi32> to vector<8x32xi32>
    %14 = arith.cmpi eq, %11, %13 : vector<8x32xi32>
    %cst_5 = arith.constant 0.000000e+00 : f32
    %15 = vector.broadcast %cst_5 : f32 to vector<8x32xf32>
    %16 = arith.select %14, %2, %15 : vector<8x32xi1>, vector<8x32xf32>
    %cst_6 = arith.constant dense<0.000000e+00> : vector<8xf32>
    %17 = vector.multi_reduction <add>, %16, %cst_6 [1] : vector<8x32xf32> to vector<8xf32>
    %18 = vector.shape_cast %17 : vector<8xf32> to vector<8x1xf32>
    %c0_7 = arith.constant 0 : index
    %c0_8 = arith.constant 0 : index
    %19 = vector.load %arg3[%c0_7, %c0_8] : memref<1x32xf32, #tpu.memory_space<vmem>>, vector<1x32xf32>
    %cst_9 = arith.constant 0.000000e+00 : f32
    %20 = vector.shape_cast %19 : vector<1x32xf32> to vector<1x32xf32>
    %21 = vector.broadcast %20 : vector<1x32xf32> to vector<8x32xf32>
    %22 = vector.broadcast %cst_9 : f32 to vector<8x32xf32>
    %23 = arith.select %14, %21, %22 : vector<8x32xi1>, vector<8x32xf32>
    %cst_10 = arith.constant dense<0.000000e+00> : vector<8xf32>
    %24 = vector.multi_reduction <add>, %23, %cst_10 [1] : vector<8x32xf32> to vector<8xf32>
    %25 = vector.shape_cast %24 : vector<8xf32> to vector<8x1xf32>
    %26 = arith.addf %4, %10 : vector<8x1xf32>
    %27 = arith.subf %26, %18 : vector<8x1xf32>
    %28 = arith.mulf %25, %27 : vector<8x1xf32>
    %c0_11 = arith.constant 0 : index
    %c0_12 = arith.constant 0 : index
    %29 = vector.load %arg4[%c0_11, %c0_12] : memref<8x1xf32, #tpu.memory_space<vmem>>, vector<8x1xf32>
    tpu.vector_store %arg4[%c0_11, %c0_12], %28 {strides = array<i32>} : memref<8x1xf32, #tpu.memory_space<vmem>>, vector<8x1xf32>,
    return
  }
  func.func @transform_0(%arg0: i32) -> (i32, i32) {
    %c0_i32 = arith.constant 0 : i32
    %c0_i32_0 = arith.constant 0 : i32
    return %arg0, %c0_i32 : i32, i32
  }
  func.func @transform_1(%arg0: i32) -> (i32, i32) {
    %c0_i32 = arith.constant 0 : i32
    %c0_i32_0 = arith.constant 0 : i32
    return %arg0, %c0_i32 : i32, i32
  }
  func.func @transform_2(%arg0: i32) -> (i32, i32) {
    %c0_i32 = arith.constant 0 : i32
    %c0_i32_0 = arith.constant 0 : i32
    %c0_i32_1 = arith.constant 0 : i32
    return %c0_i32, %c0_i32_0 : i32, i32
  }
  func.func @transform_3(%arg0: i32) -> (i32, i32) {
    %c0_i32 = arith.constant 0 : i32
    %c0_i32_0 = arith.constant 0 : i32
    return %arg0, %c0_i32 : i32, i32
  }
}

</mosaic_0001>

<llo_original>
// kernel: ce_loss.1
$region0: #{ce_loss.1}
  #allocation0 [shape = 'u32[]', space=smem, size = 0x4, offset = 0x4, fixed_abs, tag = 'smem constant byte address 0x4 - core index']
  #allocation1 [shape = 'u32[144,128]{1,0:T(1,128)}', space=vmem, size = 0x12000, scoped, tag = 'internal scratch']
  %s0 = inlined_call_operand.vmem [shape: f32[8,32], index: 0, kind: input, shape index: {}]
  %s1 = inlined_call_operand.vmem [shape: s32[8,1], index: 1, kind: input, shape index: {}]
  %s2 = inlined_call_operand.vmem [shape: f32[1,32], index: 2, kind: input, shape index: {}]
  %s3 = inlined_call_operand.vmem [shape: f32[8,1], index: 3, kind: output, shape index: {}]
  %s4 = sld [smem:[#allocation0]]
  $region22: #{ce_loss.1} parent=0
    _
  %s6 = ssub.s32 1, %s4
  %s7 = scalar_select 0, %s6, %s4
  // Predicated region
  $region2: #{ce_loss.1} parent=0 // pred_check
    _
  $region3: #{ce_loss.1} parent=0 // pred_check_branch
    %9 = sbr.rel (0) target = $region5
  $region4: #{ce_loss.1} parent=0 // pred_region
    _
  $region5: #{ce_loss.1} parent=0 // pred_fallthru
    _
  // Predicated region
  $region6: #{ce_loss.1} parent=0 // pred_check
    _
  $region7: #{ce_loss.1} parent=0 // pred_check_branch
    %11 = sbr.rel (0) target = $region9
  $region8: #{ce_loss.1} parent=0 // pred_region
    _
  $region9: #{ce_loss.1} parent=0 // pred_fallthru
    _
  // Predicated region
  $region10: #{ce_loss.1} parent=0 // pred_check
    _
  $region11: #{ce_loss.1} parent=0 // pred_check_branch
    %13 = sbr.rel (0) target = $region13
  $region12: #{ce_loss.1} parent=0 // pred_region
    _
  $region13: #{ce_loss.1} parent=0 // pred_fallthru
    _
  %v14 = vld [vmem:[%s0] sm:$0xff]
  %v15 = vmul.f32 %v14, 0.5
  %vm16 = vcmask 261120
  %v17 = vsel %vm16, %v15, -inf
  %18 = vmax.xlane.f32.xlu0 %v17
  %v19 = vpop.xlane.xlu0 %18
  %v20 = vsub.f32 %v15, %v19
  %v21 = vmul.f32 %v20, 1.442695
  %v22 = vpow.pop %v21
  %v23 = vsel %vm16, %v22, 0.0
  %24 = vadd.xlane.f32.xlu0 %v23
  %v25 = vpop.xlane.xlu0 %24
  %v26 = vlog2.pop %v25
  %v27 = vmul.f32 %v26, 0.6931472
  %v28 = vlaneseq
  %v29 = vand.u32 %v28, 127
  %v30 = vld [vmem:[%s1] sm:$0xff]
  %31 = vset.pattern.permute.xlu0 0
  %32 = vperm.xlu0 %31, %v30
  %v33 = vpop.permute.xlu0 %32
  %vm34 = vcmp.eq.s32.totalorder %v29, %v33
  %v35 = vsel %vm34, %v15, 0.0
  %v36 = vsel %vm16, %v35, 0.0
  %37 = vadd.xlane.f32.xlu0 %v36
  %v38 = vpop.xlane.xlu0 %37
  %v39 = vld [vmem:[%s2] sm:$0x1]
  %v41 = vlaneseq
  %v42 = vshrl.u32 %v41, 7
  %v43 = vsub.s32 0, %v42
  %v44 = vrot.slane %v39, %v43
  %v46 = vsel %vm34, %v44, 0.0
  %v47 = vsel %vm16, %v46, 0.0
  %48 = vadd.xlane.f32.xlu0 %v47
  %v49 = vpop.xlane.xlu0 %48
  %v50 = vadd.f32 %v19, %v27
  %v51 = vsub.f32 %v50, %v38
  %v52 = vmul.f32 %v49, %v51
  %vm53 = vcmask 7168
  %54 = vst.msk [vmem:[%s3] sm:$0xff] %vm53, %v52
  // Predicated region
  $region14: #{ce_loss.1} parent=0 // pred_check
    _
  $region15: #{ce_loss.1} parent=0 // pred_check_branch
    %56 = sbr.rel (0) target = $region17
  $region16: #{ce_loss.1} parent=0 // pred_region
    _
  $region17: #{ce_loss.1} parent=0 // pred_fallthru
    _
  // Predicated region
  $region18: #{ce_loss.1} parent=0 // pred_check
    _
  $region19: #{ce_loss.1} parent=0 // pred_check_branch
    %58 = sbr.rel (0) target = $region21
  $region20: #{ce_loss.1} parent=0 // pred_region
    _
  $region21: #{ce_loss.1} parent=0 // pred_fallthru
    _

</llo_original>
